<compile_context>
chip_gen: v5e
topology: v5e:2x2
jax: 0.10.0
libtpu: 0.0.40
codegen_flags: <defaults>
</compile_context>

<pallas_src>
import functools

import jax
import jax.numpy as jnp
from jax.experimental import pallas as pl
from jax.experimental.pallas import tpu as pltpu


def _l2norm_kernel(x_ref, w_ref, o_ref, *, eps):
    # x_ref: (C, T)  channels on sublanes, flattened H*W on lanes
    # w_ref: (C, 1)  grid-invariant per-channel scale (DMA'd once)
    # o_ref: (C, T)
    x = x_ref[...].astype(jnp.float32)
    w = w_ref[...].astype(jnp.float32)                 # hoisted once per block
    sq_sum = jnp.sum(x * x, axis=0, keepdims=True)     # (1, T) channel reduce (VPU/XLU)
    # Match PyTorch: eps added AFTER the sqrt; exact reciprocal for 1e-5 parity.
    inv = pl.reciprocal(jnp.sqrt(sq_sum) + eps, approx=False)   # (1, T)
    o_ref[...] = (x * inv * w).astype(o_ref.dtype)


def _vmem_budgets():
    """Generation-aware (vmem_limit_bytes, tile_budget_bytes).

    v5e/v6e: 128 MiB physical VMEM -> limit 64 MiB, tile budget 32 MiB.
    v7x:      64 MiB physical VMEM -> limit 32 MiB, tile budget 16 MiB.
    """
    try:
        cap = int(getattr(pltpu.get_tpu_info(), "vmem_capacity_bytes",
                          128 * 1024 * 1024))
    except Exception:
        cap = 128 * 1024 * 1024
    vmem_limit = min(cap // 2, 64 * 1024 * 1024)
    tile_budget = vmem_limit // 2     # headroom for compiler temporaries / pipelining
    return vmem_limit, tile_budget


def _pick_tile(P, C, itemsize, budget_bytes, *, max_tile=8192):
    """Largest lane tile under the budget: full P if it fits (one contiguous DMA
    per batch, no masked tail), else the largest multiple of 128 up to max_tile.

    Per flattened-spatial column we hold: 2 double-buffered (in + out) blocks in
    the I/O dtype plus the in-kernel f32 upcast temporaries (~2x C f32 words)."""
    per_col = 4 * C * itemsize + 2 * 4 * C
    if P * per_col <= budget_bytes:
        return P
    cap = (budget_bytes // per_col) // 128 * 128
    return max(128, min(max_tile, cap))


def l2norm(x, weight, *, eps=1e-10):
    """x: (N, C, H, W) NCHW, weight: (C,). Returns NCHW, same dtype as x."""
    N, C, H, W = x.shape
    P = H * W

    # Free reshapes only -- no transpose passes over HBM.
    x3 = x.reshape(N, C, P)
    w2 = weight.reshape(C, 1)

    itemsize = jnp.dtype(x.dtype).itemsize
    vmem_limit, tile_budget = _vmem_budgets()
    tile = _pick_tile(P, C, itemsize, tile_budget)

    # v7x has 2 TensorCores sharing HBM: make sure there are >= 2 parallel grid
    # steps. Harmless (~0.35us extra step) on single-core generations.
    if N * pl.cdiv(P, tile) < 2 and P >= 256:
        half = ((-(-P // 2)) + 127) // 128 * 128   # ceil(P/2) rounded up to 128
        if half < P:
            tile = half

    grid = (N, pl.cdiv(P, tile))                   # tail tile handled by masked stores

    cost = pl.CostEstimate(
        flops=4 * N * C * P,                       # square, reduce-add, 2 muls
        transcendentals=2 * N * P,                 # sqrt + reciprocal per column
        bytes_accessed=2 * N * C * P * itemsize
        + C * jnp.dtype(weight.dtype).itemsize,
    )

    out3 = pl.pallas_call(
        functools.partial(_l2norm_kernel, eps=eps),
        out_shape=jax.ShapeDtypeStruct((N, C, P), x.dtype),
        grid=grid,
        in_specs=[
            pl.BlockSpec((None, C, tile), lambda n, p: (n, 0, p)),   # x slab
            pl.BlockSpec((C, 1), lambda n, p: (0, 0)),               # weight (invariant)
        ],
        out_specs=pl.BlockSpec((None, C, tile), lambda n, p: (n, 0, p)),
        compiler_params=pltpu.CompilerParams(
            dimension_semantics=("parallel", "parallel"),
            vmem_limit_bytes=vmem_limit,
        ),
        cost_estimate=cost,
    )(x3, w2)

    return out3.reshape(N, C, H, W)


def l2norm_ref(x, weight, eps=1e-10):
    norm = jnp.sqrt(jnp.sum(x * x, axis=1, keepdims=True)) + eps
    return weight[None, :, None, None] * (x / norm)


if __name__ == "__main__":
    key = jax.random.PRNGKey(0)
    gamma = 20.0  # L2Norm.__init__ scale; init.constant_(weight, gamma)

    # Primary small test (matches module defaults: batch=2, channels=4, spatial=16).
    N, C, H, W = 2, 4, 16, 16
    x = jax.random.normal(key, (N, C, H, W), dtype=jnp.float32)
    weight = jnp.full((C,), gamma, dtype=jnp.float32)

    out = jax.block_until_ready(l2norm(x, weight))
    ref = l2norm_ref(x, weight)
    assert out.shape == (N, C, H, W)
    assert jnp.allclose(out, ref, atol=1e-5, rtol=1e-5), "mismatch vs reference (small)"

    # Secondary check: realistic C, odd spatial size. N=1 forces the 2-step
    # (megacore) split of the flattened H*W axis and exercises the masked tail.
    k2 = jax.random.PRNGKey(1)
    N2, C2, H2, W2 = 1, 256, 48, 48   # P = 2304 -> two tiles of 1152
    x2 = jax.random.normal(k2, (N2, C2, H2, W2), dtype=jnp.float32)
    w2 = jnp.full((C2,), gamma, dtype=jnp.float32)

    out2 = jax.block_until_ready(l2norm(x2, w2))
    ref2 = l2norm_ref(x2, w2)
    assert jnp.allclose(out2, ref2, atol=1e-4, rtol=1e-5), "mismatch vs reference (tail)"

    # Tertiary: bf16 I/O path (half the HBM traffic; kernel upcasts internally).
    x3 = x2.astype(jnp.bfloat16)
    out3 = jax.block_until_ready(l2norm(x3, w2))
    ref3 = l2norm_ref(x3.astype(jnp.float32), w2)
    assert jnp.allclose(out3.astype(jnp.float32), ref3, atol=2e-1, rtol=2e-2), \
        "mismatch vs reference (bf16)"

    print("KERNEL_OK")
</pallas_src>

<mosaic_0001>
module attributes {stable_mosaic.version = 11 : i64} {
  func.func @_l2norm_kernel(%arg0: i32, %arg1: i32, %arg2: memref<1x4x256xf32, #tpu.memory_space<vmem>>, %arg3: memref<4x1xf32, #tpu.memory_space<vmem>>, %arg4: memref<1x4x256xf32, #tpu.memory_space<vmem>>) attributes {dimension_semantics = [#tpu.dimension_semantics<parallel>, #tpu.dimension_semantics<parallel>], iteration_bounds = array<i64: 2, 1>, scalar_prefetch = 0 : i64, scratch_operands = 0 : i64, tpu.core_type = #tpu.core_type<tc>, window_params = [{transform_indices = @transform_0, window_bounds = array<i64: 1, 4, 256>}, {pipeline_mode = #tpu.pipeline_mode<synchronous>, transform_indices = @transform_1, window_bounds = array<i64: 4, 1>}, {transform_indices = @transform_2, window_bounds = array<i64: 1, 4, 256>}]} {
    %c0 = arith.constant 0 : index
    %c0_0 = arith.constant 0 : index
    %c0_1 = arith.constant 0 : index
    %0 = vector.load %arg2[%c0, %c0_0, %c0_1] : memref<1x4x256xf32, #tpu.memory_space<vmem>>, vector<1x4x256xf32>
    %1 = vector.shape_cast %0 : vector<1x4x256xf32> to vector<4x256xf32>
    %c0_2 = arith.constant 0 : index
    %c0_3 = arith.constant 0 : index
    %2 = vector.load %arg3[%c0_2, %c0_3] : memref<4x1xf32, #tpu.memory_space<vmem>>, vector<4x1xf32>
    %3 = arith.mulf %1, %1 : vector<4x256xf32>
    %cst = arith.constant dense<0.000000e+00> : vector<256xf32>
    %4 = vector.multi_reduction <add>, %3, %cst [0] : vector<4x256xf32> to vector<256xf32>
    %5 = vector.shape_cast %4 : vector<256xf32> to vector<1x256xf32>
    %6 = math.sqrt %5 : vector<1x256xf32>
    %cst_4 = arith.constant 1.000000e-10 : f32
    %7 = vector.broadcast %cst_4 : f32 to vector<1x256xf32>
    %8 = arith.addf %6, %7 : vector<1x256xf32>
    %9 = tpu.reciprocal %8 : vector<1x256xf32> -> vector<1x256xf32>
    %10 = vector.broadcast %9 : vector<1x256xf32> to vector<4x256xf32>
    %11 = arith.mulf %1, %10 : vector<4x256xf32>
    %12 = vector.broadcast %2 : vector<4x1xf32> to vector<4x256xf32>
    %13 = arith.mulf %11, %12 : vector<4x256xf32>
    %c0_5 = arith.constant 0 : index
    %c0_6 = arith.constant 0 : index
    %c0_7 = arith.constant 0 : index
    %14 = vector.load %arg4[%c0_5, %c0_6, %c0_7] : memref<1x4x256xf32, #tpu.memory_space<vmem>>, vector<1x4x256xf32>
    %15 = vector.shape_cast %14 : vector<1x4x256xf32> to vector<4x256xf32>
    %16 = vector.shape_cast %13 : vector<4x256xf32> to vector<1x4x256xf32>
    tpu.vector_store %arg4[%c0_5, %c0_6, %c0_7], %16 {strides = array<i32>} : memref<1x4x256xf32, #tpu.memory_space<vmem>>, vector<1x4x256xf32>,
    return
  }
  func.func @transform_0(%arg0: i32, %arg1: i32) -> (i32, i32, i32) {
    %c0_i32 = arith.constant 0 : i32
    %c0_i32_0 = arith.constant 0 : i32
    return %arg0, %c0_i32, %arg1 : i32, i32, i32
  }
  func.func @transform_1(%arg0: i32, %arg1: i32) -> (i32, i32) {
    %c0_i32 = arith.constant 0 : i32
    %c0_i32_0 = arith.constant 0 : i32
    %c0_i32_1 = arith.constant 0 : i32
    return %c0_i32, %c0_i32_0 : i32, i32
  }
  func.func @transform_2(%arg0: i32, %arg1: i32) -> (i32, i32, i32) {
    %c0_i32 = arith.constant 0 : i32
    %c0_i32_0 = arith.constant 0 : i32
    return %arg0, %c0_i32, %arg1 : i32, i32, i32
  }
}

</mosaic_0001>

<llo_original>
// kernel: tpu_custom_call.1
$region0: #{tpu_custom_call.1}
  #allocation0 [shape = 'u32[]', space=smem, size = 0x4, offset = 0x4, fixed_abs, tag = 'smem constant byte address 0x4 - core index']
  #allocation1 [shape = 'u32[72,128]{1,0:T(1,128)}', space=vmem, size = 0x9000, scoped, tag = 'internal scratch']
  %s0 = inlined_call_operand.hbm [shape: f32[2,4,256], index: 0, kind: input, shape index: {}]
  %s1 = inlined_call_operand.vmem [shape: f32[4,1], index: 1, kind: input, shape index: {}]
  %s2 = inlined_call_operand.hbm [shape: f32[2,4,256], index: 2, kind: output, shape index: {}]
  %s3 = sld [smem:[#allocation0]]
  $region45: #{tpu_custom_call.1} parent=0
    _
  %s5 = ssub.s32 1, %s3
  %s6 = scalar_select 0, %s5, %s3
  $region1: #{tpu_custom_call.1} parent=0
    #allocation2 [shape = 'u8[8192]{0}', space=vmem, size = 0x2000, scoped, tag = 'input window, operand 0']
    #allocation3 [shape = 's32[2]{0}', space=sflag, size = 0x8, scoped, tag = 'scoped memory for tpu_custom_call.1']
    #allocation4 [shape = 's32[2]{0}', space=sflag, size = 0x8, scoped, tag = 'scoped memory for tpu_custom_call.1']
    #allocation5 [shape = 'u8[8192]{0}', space=vmem, size = 0x2000, scoped, tag = 'output window, operand 0']
    %7 = vsyncpa [#allocation3], 0
    %s8 = scalar_lea.sflag [#allocation3], 1
    %9 = vsyncpa %s8, 0
    %10 = vsyncpa [#allocation4], 0
    %s11 = scalar_lea.sflag [#allocation4], 1
    %12 = vsyncpa %s11, 0
    loop: start=0, step=1, limit=4
    $region2: #{tpu_custom_call.1} parent=1 // loop_pre_header
      _
    $region3: #{tpu_custom_call.1} parent=1 // loop_header
      %s14 = sphi 0, %s18
      %p15 = scmp.ge.s32.totalorder %s14, 4
      %s21 = sphi 0, %s33
      %s22 = sphi 0, %s29
      %s23 = sphi 0, %s21
      %s24 = sphi 0, %s22
      %s25 = sphi 0, %s23
      %s26 = sphi 0, %s24
      %s38 = sphi 0, %s40
      %s41 = sphi 0, %s38
      %s42 = sphi 0, %s41
      %s58 = sphi 0, %s42
      %s62 = sphi 0, %s62
      %s64 = sphi 0, %s62
      %s65 = sphi 0, %s64
      %s79 = sphi 0, %s65
      %s87 = sphi 0, %s89
      %s90 = sphi 0, %s87
      %s91 = sphi 0, %s90
      %s107 = sphi 0, %s91
    $region4: #{tpu_custom_call.1} parent=1 // loop_header_branch
      %17 = sbr.rel (%p15) target = $region8
    $region5: #{tpu_custom_call.1} parent=1 // loop_body
      %s19 = ssub.s32 %s14, 1
      %s20 = ssub.s32 %s14, 2
      %s27 = sadd.s32 1, %s22
      %p28 = scmp.ge.s32.totalorder %s27, 1
      %s29 = scalar_select %p28, 0, %s27
      %s30 = sadd.s32 1, %s21
      %s31 = scalar_select %p28, %s30, %s21
      %p32 = scmp.ge.s32.totalorder %s31, 2
      %s33 = scalar_select %p32, 0, %s31
      %s34 = ssub.s32 %s21, %s33
      %s35 = ssub.s32 %s22, %s29
      %s36 = sor.u32 %s34, %s35
      %p37 = scmp.eq.s32.totalorder %s36, 0
      %s39 = sadd.s32 %s38, 1
      %s40 = scalar_select %p37, %s38, %s39
      %p43 = pneg %p37
      %p44 = scmp.eq.s32.totalorder %s14, 1
      %p45 = por %p43, %p44
      %p46 = scmp.ne.s32.totalorder %s38, %s41
      %p47 = scmp.eq.s32.totalorder %s14, 0
      %p48 = por %p46, %p47
      %p49 = scmp.ne.s32.totalorder %s38, %s41
      %p50 = scmp.eq.s32.totalorder %s19, 1
      %p51 = por %p49, %p50
      %p52 = scmp.ne.s32.totalorder %s41, %s42
      %p53 = scmp.eq.s32.totalorder %s19, 0
      %p54 = por %p52, %p53
      %p55 = scmp.ne.s32.totalorder %s41, %s42
      %p56 = scmp.eq.s32.totalorder %s20, 1
      %p57 = por %p55, %p56
      %p59 = scmp.ne.s32.totalorder %s42, %s58
      %p60 = scmp.eq.s32.totalorder %s20, 0
      %p61 = por %p59, %p60
      %s63 = sadd.s32 %s62, 1
      %p66 = scmp.eq.s32.totalorder %s14, 1
      %p67 = scmp.ne.s32.totalorder %s62, %s64
      %p68 = scmp.eq.s32.totalorder %s14, 0
      %p69 = por %p67, %p68
      %p70 = scmp.ne.s32.totalorder %s62, %s64
      %p71 = scmp.eq.s32.totalorder %s19, 1
      %p72 = por %p70, %p71
      %p73 = scmp.ne.s32.totalorder %s64, %s65
      %p74 = scmp.eq.s32.totalorder %s19, 0
      %p75 = por %p73, %p74
      %p76 = scmp.ne.s32.totalorder %s64, %s65
      %p77 = scmp.eq.s32.totalorder %s20, 1
      %p78 = por %p76, %p77
      %p80 = scmp.ne.s32.totalorder %s65, %s79
      %p81 = scmp.eq.s32.totalorder %s20, 0
      %p82 = por %p80, %p81
      %s83 = ssub.s32 %s21, %s33
      %s84 = ssub.s32 %s22, %s29
      %s85 = sor.u32 %s83, %s84
      %p86 = scmp.eq.s32.totalorder %s85, 0
      %s88 = sadd.s32 %s87, 1
      %s89 = scalar_select %p86, %s87, %s88
      %p92 = pneg %p86
      %p93 = scmp.eq.s32.totalorder %s14, 1
      %p94 = por %p92, %p93
      %p95 = scmp.ne.s32.totalorder %s87, %s90
      %p96 = scmp.eq.s32.totalorder %s14, 0
      %p97 = por %p95, %p96
      %p98 = scmp.ne.s32.totalorder %s87, %s90
      %p99 = scmp.eq.s32.totalorder %s19, 1
      %p100 = por %p98, %p99
      %p101 = scmp.ne.s32.totalorder %s90, %s91
      %p102 = scmp.eq.s32.totalorder %s19, 0
      %p103 = por %p101, %p102
      %p104 = scmp.ne.s32.totalorder %s90, %s91
      %p105 = scmp.eq.s32.totalorder %s20, 1
      %p106 = por %p104, %p105
      %p108 = scmp.ne.s32.totalorder %s91, %s107
      %p109 = scmp.eq.s32.totalorder %s20, 0
      %p110 = por %p108, %p109
      %p111 = scmp.le.s32.totalorder 1, %s14
      %p112 = scmp.lt.s32.totalorder %s14, 3
      %p113 = pnand %p111, %p112
      %p114 = pneg %p113
      // Predicated region
      $region9: #{tpu_custom_call.1} parent=5 // pred_check
        _
      $region10: #{tpu_custom_call.1} parent=5 // pred_check_branch
        %116 = sbr.rel (%p113) target = $region12
      $region11: #{tpu_custom_call.1} parent=5 // pred_region
        %s117 = ssub.s32 %s14, 1
        // Predicated region
        $region13: #{tpu_custom_call.1} parent=11 // pred_check
          %p118 = pneg %p75
        $region14: #{tpu_custom_call.1} parent=11 // pred_check_branch
          %120 = sbr.rel (%p118) target = $region16
        $region15: #{tpu_custom_call.1} parent=11 // pred_region
          _
        $region16: #{tpu_custom_call.1} parent=11 // pred_fallthru
          _
      $region12: #{tpu_custom_call.1} parent=5 // pred_fallthru
        _
      %p121 = scmp.lt.s32.totalorder %s14, 2
      // Predicated region
      $region17: #{tpu_custom_call.1} parent=5 // pred_check
        %p122 = pneg %p121
      $region18: #{tpu_custom_call.1} parent=5 // pred_check_branch
        %124 = sbr.rel (%p122) target = $region20
      $region19: #{tpu_custom_call.1} parent=5 // pred_region
        // Predicated region
        $region21: #{tpu_custom_call.1} parent=19 // pred_check
          %p125 = pneg %p48
        $region22: #{tpu_custom_call.1} parent=19 // pred_check_branch
          %127 = sbr.rel (%p125) target = $region24
        $region23: #{tpu_custom_call.1} parent=19 // pred_region
          %s128 = sand.u32 %s38, 1
          %s129 = scalar_lea.sflag [#allocation3], %s128
          %s130 = sand.u32 %s38, 1
          %s131 = smul.addr %s130, 8
          %s132 = scalar_lea.vmem [#allocation2], %s131
          %s133 = smul.u32 2, %s22
          %135 = vsyncadd %s129, 0
          %s136 = smul.addr %s21, 2
          %s137 = sadd.s32 %s133, %s136
          %s138 = smul.addr %s137, 4
          %s139 = scalar_lea.hbm %s0, %s138
          %s141 = sshll.u32 %s139, 4
          %s142 = int_to_ptr.hbm [resolvable:$true] %s141
          %s143 = sshll.u32 %s132, 4
          %s144 = int_to_ptr.vmem [resolvable:$true] %s143
          %146 = dma.hbm_to_vmem [thread:$0]  %s142, 128, %s144, %s129
        $region24: #{tpu_custom_call.1} parent=19 // pred_fallthru
          _
      $region20: #{tpu_custom_call.1} parent=5 // pred_fallthru
        _
      %p147 = scmp.le.s32.totalorder 1, %s14
      %p148 = scmp.lt.s32.totalorder %s14, 3
      %p149 = pnand %p147, %p148
      %p150 = pneg %p149
      // Predicated region
      $region25: #{tpu_custom_call.1} parent=5 // pred_check
        _
      $region26: #{tpu_custom_call.1} parent=5 // pred_check_branch
        %152 = sbr.rel (%p149) target = $region28
      $region27: #{tpu_custom_call.1} parent=5 // pred_region
        %s153 = ssub.s32 %s14, 1
        %s154 = sand.u32 %s41, 1
        %s155 = scalar_lea.sflag [#allocation3], %s154
        %s156 = sand.u32 %s41, 1
        %s157 = smul.addr %s156, 8
        %s158 = scalar_lea.vmem [#allocation2], %s157
        // Predicated region
        $region29: #{tpu_custom_call.1} parent=27 // pred_check
          %p159 = pneg %p54
        $region30: #{tpu_custom_call.1} parent=27 // pred_check_branch
          %161 = sbr.rel (%p159) target = $region32
        $region31: #{tpu_custom_call.1} parent=27 // pred_region
          %163 = dma.done %s155, 128
        $region32: #{tpu_custom_call.1} parent=27 // pred_fallthru
          _
        %s164 = sand.u32 %s41, 1
        %s165 = scalar_lea.sflag [#allocation3], %s164
        %s166 = sand.u32 %s41, 1
        %s167 = smul.addr %s166, 8
        %s168 = scalar_lea.vmem [#allocation2], %s167
        %p169 = pneg %p54
        %p170 = pneg %p51
        %p171 = pneg %p75
        %p172 = pneg %p72
        %p173 = pneg %p103
        %p174 = pneg %p100
        %s175 = sand.u32 %s90, 1
        %s176 = scalar_lea.sflag [#allocation4], %s175
        %s177 = sand.u32 %s90, 1
        %s178 = smul.addr %s177, 8
        %s179 = scalar_lea.vmem [#allocation5], %s178
        %s180 = smul.u32 2, %s24
        %s181 = smul.u32 2, %s24
        %v182 = vld [vmem:[%s158] sm:$0xff]
        %v183 = vld [vmem:[%s1] sm:$0xf]
        %v184 = vmul.f32 %v182, %v182
        %186 = vst [vmem:[#allocation1] ss:$2 sm:$0xff] %v184
        %v187 = vld.sshfl [vmem:[#allocation1] sm:$0xff pattern:$0x75316420]
        %v188 = vld.sshfl [vmem:[#allocation1 + $0x8] sm:$0xff pattern:$0x75316420]
        %vm191 = vcmask 1043456
        %v192 = vsel %vm191, %v187, 0.0
        %v193 = vrot.slane %v192, 4
        %v194 = vadd.f32 %v192, %v193
        %v195 = vrot.slane %v194, 2
        %v196 = vadd.f32 %v194, %v195
        %v197 = vrot.slane %v196, 1
        %v198 = vadd.f32 %v196, %v197
        %v199 = vsel %vm191, %v188, 0.0
        %v200 = vrot.slane %v199, 4
        %v201 = vadd.f32 %v199, %v200
        %v202 = vrot.slane %v201, 2
        %v203 = vadd.f32 %v201, %v202
        %v204 = vrot.slane %v203, 1
        %v205 = vadd.f32 %v203, %v204
        %v206 = vrsqrt.pop %v198
        %v207 = vmul.f32 %v206, %v198
        %v208 = vmul.f32 %v207, %v206
        %v209 = vmul.f32 0.5, %v208
        %v210 = vsub.f32 1.5, %v209
        %v211 = vmul.f32 %v206, %v210
        %v212 = vmul.f32 %v198, %v211
        %vm213 = vcmp.eq.f32.partialorder %v198, inf
        %v214 = vsel %vm213, %v198, %v212
        %vm215 = vcmp.eq.f32.partialorder %v198, 0.0
        %v216 = vand.u32 %v198, 2147483648
        %v217 = vsel %vm215, %v216, %v214
        %v218 = vrsqrt.pop %v205
        %v219 = vmul.f32 %v218, %v205
        %v220 = vmul.f32 %v219, %v218
        %v221 = vmul.f32 0.5, %v220
        %v222 = vsub.f32 1.5, %v221
        %v223 = vmul.f32 %v218, %v222
        %v224 = vmul.f32 %v205, %v223
        %vm225 = vcmp.eq.f32.partialorder %v205, inf
        %v226 = vsel %vm225, %v205, %v224
        %vm227 = vcmp.eq.f32.partialorder %v205, 0.0
        %v228 = vand.u32 %v205, 2147483648
        %v229 = vsel %vm227, %v228, %v226
        %v230 = vadd.f32 %v217, 1e-10
        %v231 = vadd.f32 %v229, 1e-10
        %v232 = vrcp.pop %v230
        %v233 = vmul.f32 %v230, %v232
        %v234 = vsub.f32 1.0, %v233
        %v235 = vmul.f32 %v232, %v234
        %v236 = vadd.f32 %v232, %v235
        %vm237 = vweird.f32 %v230
        %vm238 = vweird.f32 %v232
        %vm239 = vmor %vm237, %vm238
        %v240 = vsel %vm239, %v232, %v236
        %v241 = vand.u32 2147483647, %v230
        %vm242 = vcmp.eq.f32.partialorder %v241, 8.507059e+37
        %v243 = vand.u32 %v230, 2147483648
        %v244 = vor.u32 1.1754944e-38, %v243
        %v245 = vsel %vm242, %v244, %v240
        %v246 = vrcp.pop %v231
        %v247 = vmul.f32 %v231, %v246
        %v248 = vsub.f32 1.0, %v247
        %v249 = vmul.f32 %v246, %v248
        %v250 = vadd.f32 %v246, %v249
        %vm251 = vweird.f32 %v231
        %vm252 = vweird.f32 %v246
        %vm253 = vmor %vm251, %vm252
        %v254 = vsel %vm253, %v246, %v250
        %v255 = vand.u32 2147483647, %v231
        %vm256 = vcmp.eq.f32.partialorder %v255, 8.507059e+37
        %v257 = vand.u32 %v231, 2147483648
        %v258 = vor.u32 1.1754944e-38, %v257
        %v259 = vsel %vm256, %v258, %v254
        %v262 = vrot.slane %v259, 4
        %v263 = vsel %vm191, %v245, %v262
        %v265 = vmul.f32 %v182, %v263
        %267 = vset.pattern.permute.xlu0 0
        %268 = vperm.xlu0 %267, %v183
        %v269 = vpop.permute.xlu0 %268
        %v271 = vunpack.c.l.s4 839922192
        %v272 = vunpack.c.0.s8 %v271
        %v273 = vperm.slane %v269, %v272
        %v275 = vmul.f32 %v265, %v273
        %276 = vst [vmem:[%s179] sm:$0xff] %v275
        %s277 = sand.u32 %s90, 1
        %s278 = scalar_lea.sflag [#allocation4], %s277
        %s279 = sand.u32 %s90, 1
        %s280 = smul.addr %s279, 8
        %s281 = scalar_lea.vmem [#allocation5], %s280
        // Predicated region
        $region33: #{tpu_custom_call.1} parent=27 // pred_check
          %p282 = pneg %p100
        $region34: #{tpu_custom_call.1} parent=27 // pred_check_branch
          %284 = sbr.rel (%p282) target = $region36
        $region35: #{tpu_custom_call.1} parent=27 // pred_region
          %s285 = smul.u32 2, %s24
          %287 = vsyncadd %s278, 0
          %s288 = smul.addr %s23, 2
          %s289 = sadd.s32 %s285, %s288
          %s290 = smul.addr %s289, 4
          %s291 = scalar_lea.hbm %s2, %s290
          %s293 = sshll.u32 %s281, 4
          %s294 = int_to_ptr.vmem [resolvable:$true] %s293
          %s295 = sshll.u32 %s291, 4
          %s296 = int_to_ptr.hbm [resolvable:$true] %s295
          %298 = dma.vmem_to_hbm [thread:$0]  %s294, 128, %s296, %s278
        $region36: #{tpu_custom_call.1} parent=27 // pred_fallthru
          _
      $region28: #{tpu_custom_call.1} parent=5 // pred_fallthru
        _
      %p299 = scmp.le.s32.totalorder 2, %s14
      // Predicated region
      $region37: #{tpu_custom_call.1} parent=5 // pred_check
        %p300 = pneg %p299
      $region38: #{tpu_custom_call.1} parent=5 // pred_check_branch
        %302 = sbr.rel (%p300) target = $region40
      $region39: #{tpu_custom_call.1} parent=5 // pred_region
        %s303 = ssub.s32 %s14, 2
        // Predicated region
        $region41: #{tpu_custom_call.1} parent=39 // pred_check
          %p304 = pneg %p106
        $region42: #{tpu_custom_call.1} parent=39 // pred_check_branch
          %306 = sbr.rel (%p304) target = $region44
        $region43: #{tpu_custom_call.1} parent=39 // pred_region
          %s307 = sand.u32 %s91, 1
          %s308 = scalar_lea.sflag [#allocation4], %s307
          %s309 = sand.u32 %s91, 1
          %s310 = smul.addr %s309, 8
          %s311 = scalar_lea.vmem [#allocation5], %s310
          %313 = dma.done %s308, 128
        $region44: #{tpu_custom_call.1} parent=39 // pred_fallthru
          _
      $region40: #{tpu_custom_call.1} parent=5 // pred_fallthru
        _
    $region6: #{tpu_custom_call.1} parent=1 // loop_footer
      %s18 = sadd.s32 1, %s14
    $region7: #{tpu_custom_call.1} parent=1 // loop_footer_branch
      %13 = sbr.rel target = $region3
    $region8: #{tpu_custom_call.1} parent=1 // loop_exit
      _
    %314 = vsyncpa [#allocation3], 1
    %s315 = scalar_lea.sflag [#allocation3], 1
    %316 = vsyncpa %s315, 1
    %317 = vsyncpa [#allocation4], 1
    %s318 = scalar_lea.sflag [#allocation4], 1
    %319 = vsyncpa %s318, 1

</llo_original>
